<compile_context>
chip_gen: v7x
topology: tpu7x:2x2x1
jax: 0.10.0
libtpu: 0.0.40
codegen_flags: <defaults>
</compile_context>

<pallas_src>
import functools

import jax
import jax.numpy as jnp
from jax.experimental import pallas as pl
from jax.experimental.pallas import tpu as pltpu


# ----------------------------- fused kernel ---------------------------------


def _make_fused_kernel(num_layers, out_valid):
    """Kernel computing the whole MLP on one batch tile: Linears + ReLU + softmax."""

    def kernel(*refs):
        # refs = (x_ref, w0_ref, b0_ref, w1_ref, b1_ref, ..., o_ref)
        x_ref = refs[0]
        o_ref = refs[-1]
        wb_refs = refs[1:-1]

        h = x_ref[...]                              # bf16 activations (MXU lhs)
        for li in range(num_layers):
            w_ref = wb_refs[2 * li]
            b_ref = wb_refs[2 * li + 1]
            lhs = h if h.dtype == w_ref.dtype else h.astype(w_ref.dtype)
            # MXU matmul, f32 accumulation; bias (1, out) broadcast, in f32.
            y = jnp.dot(lhs, w_ref[...], preferred_element_type=jnp.float32)
            y = y + b_ref[...]
            if li < num_layers - 1:
                h = jnp.maximum(y, 0.0)             # ReLU on the VPU, f32
            else:
                # Softmax over valid output lanes only: padded lanes get a huge
                # negative so exp() underflows to exactly 0.
                col = jax.lax.broadcasted_iota(jnp.int32, y.shape, 1)
                y = jnp.where(col < out_valid, y, -1e30)
                y_max = jnp.max(y, axis=1, keepdims=True)
                e = jnp.exp(y - y_max)              # EUP
                denom = jnp.sum(e, axis=1, keepdims=True)
                h = e / denom                       # exact normalization
        o_ref[...] = h.astype(o_ref.dtype)

    return kernel


# ----------------------------- param prep (one-time) -------------------------


def _round_up(n, m):
    return ((n + m - 1) // m) * m


def prepare_slffnn_params(params, compute_dtype=jnp.bfloat16):
    """Pads weights/biases to lane-dense TPU tiles ONCE (out of the hot path).

    Weights are stored in `compute_dtype` (bf16 for the MXU); biases stay f32
    since the post-matmul math runs in f32.
    """
    padded = []
    logical_dims = []
    for (w, b) in params["layers"]:
        fi, fo = w.shape
        p_fi, p_fo = _round_up(fi, 128), _round_up(fo, 128)
        w_p = jnp.pad(w.astype(compute_dtype), ((0, p_fi - fi), (0, p_fo - fo)))
        b_p = jnp.pad(b.astype(jnp.float32), ((0, p_fo - fo),)).reshape(1, p_fo)
        padded.append((w_p, b_p))
        logical_dims.append((fi, fo))
    return {
        "layers": tuple(padded),
        "out_features": int(params["layers"][-1][0].shape[1]),
        "logical_dims": tuple(logical_dims),
    }


# ----------------------------- forward ---------------------------------------


_TM_MAX = 256   # batch tile; 256-granular fills the v6e/v7x MXU (128 on v5e)


@functools.partial(jax.jit, static_argnames=("out_features", "logical_dims"))
def _forward_impl(padded_layers, x, *, out_features, logical_dims):
    num_layers = len(padded_layers)
    batch, in_f = x.shape
    p_in = padded_layers[0][0].shape[0]
    p_out = padded_layers[-1][0].shape[1]
    compute_dtype = padded_layers[0][0].dtype

    # --- batch tiling: small batches -> single tile; big -> 256-row tiles ----
    pb = _round_up(batch, 8)
    if pb > _TM_MAX:
        pb = _round_up(batch, _TM_MAX)
        tm = _TM_MAX
    else:
        tm = pb

    # Only input padding stays in the hot path (single pad op).
    x_p = jnp.pad(x.astype(compute_dtype), ((0, pb - batch), (0, p_in - in_f)))

    args = [x_p]
    in_specs = [pl.BlockSpec((tm, p_in), lambda i: (i, 0))]

    # VMEM budget: blocks are double-buffered by the pipeliner.
    vmem_bytes = 2 * tm * p_in * x_p.dtype.itemsize
    for (w_p, b_p) in padded_layers:
        args += [w_p, b_p]
        in_specs += [
            pl.BlockSpec(w_p.shape, lambda i: (0, 0)),   # weights stay resident
            pl.BlockSpec(b_p.shape, lambda i: (0, 0)),
        ]
        vmem_bytes += 2 * (w_p.size * w_p.dtype.itemsize + b_p.size * 4)
    vmem_bytes += 2 * tm * p_out * 4
    vmem_limit = int(min(64 << 20, max(2 * vmem_bytes + (4 << 20), 8 << 20)))

    # CostEstimate from logical (unpadded) dims.
    flops = sum(2 * batch * fi * fo for (fi, fo) in logical_dims)
    bytes_accessed = batch * in_f * compute_dtype.itemsize
    for (fi, fo) in logical_dims:
        bytes_accessed += fi * fo * compute_dtype.itemsize + fo * 4
    bytes_accessed += batch * out_features * 4

    kernel = _make_fused_kernel(num_layers, out_features)

    out_p = pl.pallas_call(
        kernel,
        out_shape=jax.ShapeDtypeStruct((pb, p_out), jnp.float32),
        grid=(pb // tm,),
        in_specs=in_specs,
        out_specs=pl.BlockSpec((tm, p_out), lambda i: (i, 0)),
        compiler_params=pltpu.CompilerParams(
            dimension_semantics=("parallel",),
            vmem_limit_bytes=vmem_limit,
        ),
        cost_estimate=pl.CostEstimate(
            flops=flops,
            transcendentals=batch * out_features,
            bytes_accessed=bytes_accessed,
        ),
    )(*args)

    # slice the padded slab back to the logical output
    return out_p[:batch, :out_features]


def slffnn_forward(prepared_params, x):
    """Fused forward pass: one pallas_call for the whole network."""
    return _forward_impl(
        prepared_params["layers"], x,
        out_features=prepared_params["out_features"],
        logical_dims=prepared_params["logical_dims"],
    )


# ----------------------------- params ----------------------------------------


def init_slffnn_params(key, input_size, output_size, hidden_layer_size,
                       nb_hidden_layers=1):
    """Deterministic init mirroring the PyTorch module's parameter shapes.

    StandardSLFFNN uses nb_hidden_layers=1, i.e. exactly two Linear layers:
    input_size -> hidden_layer_size -> output_size.
    """
    sizes = ([(input_size, hidden_layer_size)]
             + [(hidden_layer_size, hidden_layer_size)] * (nb_hidden_layers - 1)
             + [(hidden_layer_size, output_size)])
    keys = jax.random.split(key, 2 * len(sizes))
    layers = []
    for li, (fan_in, fan_out) in enumerate(sizes):
        bound = 1.0 / jnp.sqrt(fan_in)
        w = jax.random.uniform(keys[2 * li], (fan_in, fan_out),
                               minval=-bound, maxval=bound, dtype=jnp.float32)
        b = jax.random.uniform(keys[2 * li + 1], (fan_out,),
                               minval=-bound, maxval=bound, dtype=jnp.float32)
        layers.append((w, b))
    return {"layers": layers}


# ----------------------------- main -------------------------------------------

if __name__ == "__main__":
    input_size = 16
    hidden_layer_size = 32
    output_size = 8
    batch = 2

    key = jax.random.PRNGKey(0)
    pkey, xkey = jax.random.split(key)

    # StandardSLFFNN == StandardFFNN with nb_hidden_layers=1
    params = init_slffnn_params(pkey, input_size, output_size,
                                hidden_layer_size, nb_hidden_layers=1)
    prepared = prepare_slffnn_params(params)          # one-time pad + bf16 cast
    x = jax.random.normal(xkey, (batch, input_size), dtype=jnp.float32)

    out = slffnn_forward(prepared, x)
    out = jax.block_until_ready(out)

    # sanity check against a pure-JAX f32 reference
    ref = x
    for w, b in params["layers"][:-1]:
        ref = jnp.maximum(ref @ w + b, 0.0)
    w, b = params["layers"][-1]
    ref = jax.nn.softmax(ref @ w + b, axis=1)

    assert out.shape == (batch, output_size)
    # bf16 matmul operands -> allow ~1e-2 deviation vs f32 reference
    assert jnp.allclose(out, ref, atol=2e-2, rtol=2e-2)
    # exact divide in the softmax -> rows sum to 1 to f32 precision
    assert jnp.allclose(jnp.sum(out, axis=1), 1.0, atol=1e-5)

    print("KERNEL_OK")
</pallas_src>

<mosaic_0001>
module attributes {stable_mosaic.version = 11 : i64} {
  func.func @kernel(%arg0: i32, %arg1: memref<8x128xbf16, #tpu.memory_space<vmem>>, %arg2: memref<128x128xbf16, #tpu.memory_space<vmem>>, %arg3: memref<1x128xf32, #tpu.memory_space<vmem>>, %arg4: memref<128x128xbf16, #tpu.memory_space<vmem>>, %arg5: memref<1x128xf32, #tpu.memory_space<vmem>>, %arg6: memref<8x128xf32, #tpu.memory_space<vmem>>) attributes {dimension_semantics = [#tpu.dimension_semantics<parallel>], iteration_bounds = array<i64: 1>, scalar_prefetch = 0 : i64, scratch_operands = 0 : i64, tpu.core_type = #tpu.core_type<tc>, window_params = [{transform_indices = @transform_0, window_bounds = array<i64: 8, 128>}, {pipeline_mode = #tpu.pipeline_mode<synchronous>, transform_indices = @transform_1, window_bounds = array<i64: 128, 128>}, {pipeline_mode = #tpu.pipeline_mode<synchronous>, transform_indices = @transform_2, window_bounds = array<i64: 1, 128>}, {pipeline_mode = #tpu.pipeline_mode<synchronous>, transform_indices = @transform_3, window_bounds = array<i64: 128, 128>}, {pipeline_mode = #tpu.pipeline_mode<synchronous>, transform_indices = @transform_4, window_bounds = array<i64: 1, 128>}, {transform_indices = @transform_5, window_bounds = array<i64: 8, 128>}]} {
    %c0 = arith.constant 0 : index
    %c0_0 = arith.constant 0 : index
    %0 = vector.load %arg1[%c0, %c0_0] : memref<8x128xbf16, #tpu.memory_space<vmem>>, vector<8x128xbf16>
    %c0_1 = arith.constant 0 : index
    %c0_2 = arith.constant 0 : index
    %1 = vector.load %arg2[%c0_1, %c0_2] : memref<128x128xbf16, #tpu.memory_space<vmem>>, vector<128x128xbf16>
    %cst = arith.constant dense<0.000000e+00> : vector<8x128xf32>
    %2 = tpu.matmul %0, %1, %cst {dimension_numbers = #tpu.dot_dimension_numbers<[1], [0], [0], [1], [0, 0, 1, 1], [], []>} : vector<8x128xbf16>, vector<128x128xbf16>, vector<8x128xf32> -> vector<8x128xf32>
    %c0_3 = arith.constant 0 : index
    %c0_4 = arith.constant 0 : index
    %3 = vector.load %arg3[%c0_3, %c0_4] : memref<1x128xf32, #tpu.memory_space<vmem>>, vector<1x128xf32>
    %4 = vector.broadcast %3 : vector<1x128xf32> to vector<8x128xf32>
    %5 = arith.addf %2, %4 : vector<8x128xf32>
    %cst_5 = arith.constant 0.000000e+00 : f32
    %6 = vector.broadcast %cst_5 : f32 to vector<8x128xf32>
    %7 = arith.maximumf %5, %6 : vector<8x128xf32>
    %8 = arith.truncf %7 : vector<8x128xf32> to vector<8x128xbf16>
    %c0_6 = arith.constant 0 : index
    %c0_7 = arith.constant 0 : index
    %9 = vector.load %arg4[%c0_6, %c0_7] : memref<128x128xbf16, #tpu.memory_space<vmem>>, vector<128x128xbf16>
    %cst_8 = arith.constant dense<0.000000e+00> : vector<8x128xf32>
    %10 = tpu.matmul %8, %9, %cst_8 {dimension_numbers = #tpu.dot_dimension_numbers<[1], [0], [0], [1], [0, 0, 1, 1], [], []>} : vector<8x128xbf16>, vector<128x128xbf16>, vector<8x128xf32> -> vector<8x128xf32>
    %c0_9 = arith.constant 0 : index
    %c0_10 = arith.constant 0 : index
    %11 = vector.load %arg5[%c0_9, %c0_10] : memref<1x128xf32, #tpu.memory_space<vmem>>, vector<1x128xf32>
    %12 = vector.broadcast %11 : vector<1x128xf32> to vector<8x128xf32>
    %13 = arith.addf %10, %12 : vector<8x128xf32>
    %14 = tpu.iota {dimensions = array<i32: 1>} : vector<8x128xi32>
    %c8_i32 = arith.constant 8 : i32
    %15 = vector.broadcast %c8_i32 : i32 to vector<8x128xi32>
    %16 = arith.cmpi slt, %14, %15 : vector<8x128xi32>
    %cst_11 = arith.constant -1.000000e+30 : f32
    %17 = vector.broadcast %cst_11 : f32 to vector<8x128xf32>
    %18 = arith.select %16, %13, %17 : vector<8x128xi1>, vector<8x128xf32>
    %cst_12 = arith.constant dense<0xFF800000> : vector<8xf32>
    %19 = vector.multi_reduction <maximumf>, %18, %cst_12 [1] : vector<8x128xf32> to vector<8xf32>
    %20 = vector.shape_cast %19 : vector<8xf32> to vector<8x1xf32>
    %21 = vector.broadcast %20 : vector<8x1xf32> to vector<8x128xf32>
    %22 = arith.subf %18, %21 : vector<8x128xf32>
    %23 = math.exp %22 : vector<8x128xf32>
    %cst_13 = arith.constant dense<0.000000e+00> : vector<8xf32>
    %24 = vector.multi_reduction <add>, %23, %cst_13 [1] : vector<8x128xf32> to vector<8xf32>
    %25 = vector.shape_cast %24 : vector<8xf32> to vector<8x1xf32>
    %26 = vector.broadcast %25 : vector<8x1xf32> to vector<8x128xf32>
    %27 = arith.divf %23, %26 : vector<8x128xf32>
    %c0_14 = arith.constant 0 : index
    %c0_15 = arith.constant 0 : index
    %28 = vector.load %arg6[%c0_14, %c0_15] : memref<8x128xf32, #tpu.memory_space<vmem>>, vector<8x128xf32>
    tpu.vector_store %arg6[%c0_14, %c0_15], %27 {strides = array<i32>} : memref<8x128xf32, #tpu.memory_space<vmem>>, vector<8x128xf32>,
    return
  }
  func.func @transform_0(%arg0: i32) -> (i32, i32) {
    %c0_i32 = arith.constant 0 : i32
    %c0_i32_0 = arith.constant 0 : i32
    return %arg0, %c0_i32 : i32, i32
  }
  func.func @transform_1(%arg0: i32) -> (i32, i32) {
    %c0_i32 = arith.constant 0 : i32
    %c0_i32_0 = arith.constant 0 : i32
    %c0_i32_1 = arith.constant 0 : i32
    return %c0_i32, %c0_i32_0 : i32, i32
  }
  func.func @transform_2(%arg0: i32) -> (i32, i32) {
    %c0_i32 = arith.constant 0 : i32
    %c0_i32_0 = arith.constant 0 : i32
    %c0_i32_1 = arith.constant 0 : i32
    return %c0_i32, %c0_i32_0 : i32, i32
  }
  func.func @transform_3(%arg0: i32) -> (i32, i32) {
    %c0_i32 = arith.constant 0 : i32
    %c0_i32_0 = arith.constant 0 : i32
    %c0_i32_1 = arith.constant 0 : i32
    return %c0_i32, %c0_i32_0 : i32, i32
  }
  func.func @transform_4(%arg0: i32) -> (i32, i32) {
    %c0_i32 = arith.constant 0 : i32
    %c0_i32_0 = arith.constant 0 : i32
    %c0_i32_1 = arith.constant 0 : i32
    return %c0_i32, %c0_i32_0 : i32, i32
  }
  func.func @transform_5(%arg0: i32) -> (i32, i32) {
    %c0_i32 = arith.constant 0 : i32
    %c0_i32_0 = arith.constant 0 : i32
    return %arg0, %c0_i32 : i32, i32
  }
}

</mosaic_0001>

<llo_original>
// kernel: _forward_impl.1
$region0: #{_forward_impl.1}
  #allocation0 [shape = 'u32[]', space=smem, size = 0x4, offset = 0x4, fixed_abs, tag = 'smem constant byte address 0x4 - core index']
  #allocation1 [shape = 'u32[144,128]{1,0:T(1,128)}', space=vmem, size = 0x12000, scoped, tag = 'internal scratch']
  %s0 = inlined_call_operand.vmem [shape: bf16[8,128], index: 0, kind: input, shape index: {}]
  %s1 = inlined_call_operand.hbm [shape: bf16[128,128], index: 1, kind: input, shape index: {}]
  %s2 = inlined_call_operand.vmem [shape: f32[1,128], index: 2, kind: input, shape index: {}]
  %s3 = inlined_call_operand.hbm [shape: bf16[128,128], index: 3, kind: input, shape index: {}]
  %s4 = inlined_call_operand.vmem [shape: f32[1,128], index: 4, kind: input, shape index: {}]
  %s5 = inlined_call_operand.vmem [shape: f32[8,128], index: 5, kind: output, shape index: {}]
  %s6 = sld [smem:[#allocation0]]
  $region38: #{_forward_impl.1} parent=0
    _
  %s8 = ssub.s32 1, %s6
  %s9 = scalar_select 0, %s8, %s6
  $region1: #{_forward_impl.1} parent=0
    #allocation2 [shape = 'u8[32768]{0}', space=vmem, size = 0x8000, scoped, tag = 'input window, operand 1, single buffered']
    #allocation3 [shape = 's32[1]{0}', space=sflag, size = 0x4, scoped, tag = 'scoped memory for _forward_impl.1']
    #allocation4 [shape = 'u8[32768]{0}', space=vmem, size = 0x8000, scoped, tag = 'input window, operand 3, single buffered']
    #allocation5 [shape = 's32[1]{0}', space=sflag, size = 0x4, scoped, tag = 'scoped memory for _forward_impl.1']
    %10 = vsyncpa [#allocation3], 0
    %11 = vsyncpa [#allocation5], 0
    // Predicated region
    $region2: #{_forward_impl.1} parent=1 // pred_check
      _
    $region3: #{_forward_impl.1} parent=1 // pred_check_branch
      %13 = sbr.rel (0) target = $region5
    $region4: #{_forward_impl.1} parent=1 // pred_region
      _
    $region5: #{_forward_impl.1} parent=1 // pred_fallthru
      _
    // Predicated region
    $region6: #{_forward_impl.1} parent=1 // pred_check
      _
    $region7: #{_forward_impl.1} parent=1 // pred_check_branch
      %15 = sbr.rel (0) target = $region9
    $region8: #{_forward_impl.1} parent=1 // pred_region
      %s17 = ssub.s32 1024, 1024
      %18 = vsyncadd [#allocation3], %s17
      %s19 = sshll.u32 [#allocation2], 4
      %s20 = int_to_ptr.vmem [resolvable:$true] %s19
      %25 = dma.hbm_to_vmem [thread:$0]  %s1, 1024, %s20, [#allocation3], 64, 64, 4
    $region9: #{_forward_impl.1} parent=1 // pred_fallthru
      _
    // Predicated region
    $region10: #{_forward_impl.1} parent=1 // pred_check
      _
    $region11: #{_forward_impl.1} parent=1 // pred_check_branch
      %27 = sbr.rel (0) target = $region13
    $region12: #{_forward_impl.1} parent=1 // pred_region
      _
    $region13: #{_forward_impl.1} parent=1 // pred_fallthru
      _
    // Predicated region
    $region14: #{_forward_impl.1} parent=1 // pred_check
      _
    $region15: #{_forward_impl.1} parent=1 // pred_check_branch
      %29 = sbr.rel (0) target = $region17
    $region16: #{_forward_impl.1} parent=1 // pred_region
      %s31 = ssub.s32 1024, 1024
      %32 = vsyncadd [#allocation5], %s31
      %s33 = sshll.u32 [#allocation4], 4
      %s34 = int_to_ptr.vmem [resolvable:$true] %s33
      %39 = dma.hbm_to_vmem [thread:$0]  %s3, 1024, %s34, [#allocation5], 64, 64, 4
    $region17: #{_forward_impl.1} parent=1 // pred_fallthru
      _
    // Predicated region
    $region18: #{_forward_impl.1} parent=1 // pred_check
      _
    $region19: #{_forward_impl.1} parent=1 // pred_check_branch
      %41 = sbr.rel (0) target = $region21
    $region20: #{_forward_impl.1} parent=1 // pred_region
      _
    $region21: #{_forward_impl.1} parent=1 // pred_fallthru
      _
    // Predicated region
    $region22: #{_forward_impl.1} parent=1 // pred_check
      _
    $region23: #{_forward_impl.1} parent=1 // pred_check_branch
      %43 = sbr.rel (0) target = $region25
    $region24: #{_forward_impl.1} parent=1 // pred_region
      %44 = dma.done [#allocation3], 1024
    $region25: #{_forward_impl.1} parent=1 // pred_fallthru
      _
    // Predicated region
    $region26: #{_forward_impl.1} parent=1 // pred_check
      _
    $region27: #{_forward_impl.1} parent=1 // pred_check_branch
      %46 = sbr.rel (0) target = $region29
    $region28: #{_forward_impl.1} parent=1 // pred_region
      %47 = dma.done [#allocation5], 1024
    $region29: #{_forward_impl.1} parent=1 // pred_fallthru
      _
    %v49 = vld [vmem:[%s0] sm:$0xf]
    %v50 = vld [vmem:[#allocation2] sm:$0xf]
    %v51 = vld [vmem:[#allocation2 + $0x4] sm:$0xf]
    %v52 = vld [vmem:[#allocation2 + $0x8] sm:$0xf]
    %v53 = vld [vmem:[#allocation2 + $0xc] sm:$0xf]
    %v54 = vld [vmem:[#allocation2 + $0x10] sm:$0xf]
    %v55 = vld [vmem:[#allocation2 + $0x14] sm:$0xf]
    %v56 = vld [vmem:[#allocation2 + $0x18] sm:$0xf]
    %v57 = vld [vmem:[#allocation2 + $0x1c] sm:$0xf]
    %v58 = vld [vmem:[#allocation2 + $0x20] sm:$0xf]
    %v59 = vld [vmem:[#allocation2 + $0x24] sm:$0xf]
    %v60 = vld [vmem:[#allocation2 + $0x28] sm:$0xf]
    %v61 = vld [vmem:[#allocation2 + $0x2c] sm:$0xf]
    %v62 = vld [vmem:[#allocation2 + $0x30] sm:$0xf]
    %v63 = vld [vmem:[#allocation2 + $0x34] sm:$0xf]
    %v64 = vld [vmem:[#allocation2 + $0x38] sm:$0xf]
    %v65 = vld [vmem:[#allocation2 + $0x3c] sm:$0xf]
    %v66 = vld [vmem:[%s2] sm:$0x1]
    %v68 = vlaneseq
    %v69 = vshrl.u32 %v68, 7
    %v70 = vsub.s32 0, %v69
    %v71 = vrot.slane %v66, %v70
    %v89 = vunpack.c.l.b16 %v50
    %v90 = vunpack.c.l.b16 %v51
    %v91 = vunpack.c.l.b16 %v52
    %v92 = vunpack.c.l.b16 %v53
    %v93 = vunpack.c.l.b16 %v54
    %v94 = vunpack.c.l.b16 %v55
    %v95 = vunpack.c.l.b16 %v56
    %v96 = vunpack.c.l.b16 %v57
    %v97 = vunpack.c.l.b16 %v58
    %v98 = vunpack.c.l.b16 %v59
    %v99 = vunpack.c.l.b16 %v60
    %v100 = vunpack.c.l.b16 %v61
    %v101 = vunpack.c.l.b16 %v62
    %v102 = vunpack.c.l.b16 %v63
    %v103 = vunpack.c.l.b16 %v64
    %v104 = vunpack.c.l.b16 %v65
    %v105 = vpack.c.b16 %v90, %v89
    %v106 = vpack.c.b16 %v92, %v91
    %v107 = vpack.c.b16 %v94, %v93
    %v108 = vpack.c.b16 %v96, %v95
    %v109 = vpack.c.b16 %v98, %v97
    %v110 = vpack.c.b16 %v100, %v99
    %v111 = vpack.c.b16 %v102, %v101
    %v112 = vpack.c.b16 %v104, %v103
    %121 = vmatprep.subr.bf16.mxu0 0
    %122 = vmatpush1.bf16.msra.mxu0 %v105
    %123 = vmatprep.subr.bf16.mxu0 0
    %124 = vmatpush1.bf16.msra.mxu0 %v106
    %125 = vmatprep.subr.bf16.mxu0 0
    %126 = vmatpush1.bf16.msra.mxu0 %v107
    %127 = vmatprep.subr.bf16.mxu0 0
    %128 = vmatpush1.bf16.msra.mxu0 %v108
    %129 = vmatprep.subr.bf16.mxu0 0
    %130 = vmatpush1.bf16.msra.mxu0 %v109
    %131 = vmatprep.subr.bf16.mxu0 0
    %132 = vmatpush1.bf16.msra.mxu0 %v110
    %133 = vmatprep.subr.bf16.mxu0 0
    %134 = vmatpush1.bf16.msra.mxu0 %v111
    %135 = vmatprep.subr.bf16.mxu0 0
    %136 = vmatpush1.bf16.msra.mxu0 %v112
    %137 = vmatprep.subr.bf16.mxu0 0
    %138 = vmatpush1.bf16.msra.mxu0 0
    %139 = vmatprep.subr.bf16.mxu0 0
    %140 = vmatpush1.bf16.msra.mxu0 0
    %141 = vmatprep.subr.bf16.mxu0 0
    %142 = vmatpush1.bf16.msra.mxu0 0
    %143 = vmatprep.subr.bf16.mxu0 0
    %144 = vmatpush1.bf16.msra.mxu0 0
    %145 = vmatprep.subr.bf16.mxu0 0
    %146 = vmatpush1.bf16.msra.mxu0 0
    %147 = vmatprep.subr.bf16.mxu0 0
    %148 = vmatpush1.bf16.msra.mxu0 0
    %149 = vmatprep.subr.bf16.mxu0 0
    %150 = vmatpush1.bf16.msra.mxu0 0
    %151 = vmatprep.subr.bf16.mxu0 0
    %152 = vmatpush1.bf16.msra.mxu0 0
    %153 = vmatprep.mubr.bf16.mxu0 0
    %154 = vmatmul.mubr.bf16.gmra.mrb[0].mxu0 %v49
    %v155 = vpop.f32.mrb[0].mxu0
    %v156 = vadd.f32 %v71, %v155
    %v157 = vpop.f32.mrb[0].mxu0
    %v158 = vpop.f32.mrb[0].mxu0
    %v159 = vpop.f32.mrb[0].mxu0
    %160 = vdwg.mxu0
    %v161 = vmax.f32 %v156, 0.0
    %v162 = vpack.c.bf16 %v161, %v161
    %v163 = vld [vmem:[#allocation4] sm:$0xf]
    %v164 = vld [vmem:[#allocation4 + $0x4] sm:$0xf]
    %v165 = vld [vmem:[#allocation4 + $0x8] sm:$0xf]
    %v166 = vld [vmem:[#allocation4 + $0xc] sm:$0xf]
    %v167 = vld [vmem:[#allocation4 + $0x10] sm:$0xf]
    %v168 = vld [vmem:[#allocation4 + $0x14] sm:$0xf]
    %v169 = vld [vmem:[#allocation4 + $0x18] sm:$0xf]
    %v170 = vld [vmem:[#allocation4 + $0x1c] sm:$0xf]
    %v171 = vld [vmem:[#allocation4 + $0x20] sm:$0xf]
    %v172 = vld [vmem:[#allocation4 + $0x24] sm:$0xf]
    %v173 = vld [vmem:[#allocation4 + $0x28] sm:$0xf]
    %v174 = vld [vmem:[#allocation4 + $0x2c] sm:$0xf]
    %v175 = vld [vmem:[#allocation4 + $0x30] sm:$0xf]
    %v176 = vld [vmem:[#allocation4 + $0x34] sm:$0xf]
    %v177 = vld [vmem:[#allocation4 + $0x38] sm:$0xf]
    %v178 = vld [vmem:[#allocation4 + $0x3c] sm:$0xf]
    %v179 = vld [vmem:[%s4] sm:$0x1]
    %v181 = vlaneseq
    %v182 = vshrl.u32 %v181, 7
    %v183 = vsub.s32 0, %v182
    %v184 = vrot.slane %v179, %v183
    %v202 = vunpack.c.l.b16 %v163
    %v203 = vunpack.c.l.b16 %v164
    %v204 = vunpack.c.l.b16 %v165
    %v205 = vunpack.c.l.b16 %v166
    %v206 = vunpack.c.l.b16 %v167
    %v207 = vunpack.c.l.b16 %v168
    %v208 = vunpack.c.l.b16 %v169
    %v209 = vunpack.c.l.b16 %v170
    %v210 = vunpack.c.l.b16 %v171
    %v211 = vunpack.c.l.b16 %v172
    %v212 = vunpack.c.l.b16 %v173
    %v213 = vunpack.c.l.b16 %v174
    %v214 = vunpack.c.l.b16 %v175
    %v215 = vunpack.c.l.b16 %v176
    %v216 = vunpack.c.l.b16 %v177
    %v217 = vunpack.c.l.b16 %v178
    %v218 = vpack.c.b16 %v203, %v202
    %v219 = vpack.c.b16 %v205, %v204
    %v220 = vpack.c.b16 %v207, %v206
    %v221 = vpack.c.b16 %v209, %v208
    %v222 = vpack.c.b16 %v211, %v210
    %v223 = vpack.c.b16 %v213, %v212
    %v224 = vpack.c.b16 %v215, %v214
    %v225 = vpack.c.b16 %v217, %v216
    %234 = vmatprep.subr.bf16.mxu0 0
    %235 = vmatpush1.bf16.msra.mxu0 %v218
    %236 = vmatprep.subr.bf16.mxu0 0
    %237 = vmatpush1.bf16.msra.mxu0 %v219
    %238 = vmatprep.subr.bf16.mxu0 0
    %239 = vmatpush1.bf16.msra.mxu0 %v220
    %240 = vmatprep.subr.bf16.mxu0 0
    %241 = vmatpush1.bf16.msra.mxu0 %v221
    %242 = vmatprep.subr.bf16.mxu0 0
    %243 = vmatpush1.bf16.msra.mxu0 %v222
    %244 = vmatprep.subr.bf16.mxu0 0
    %245 = vmatpush1.bf16.msra.mxu0 %v223
    %246 = vmatprep.subr.bf16.mxu0 0
    %247 = vmatpush1.bf16.msra.mxu0 %v224
    %248 = vmatprep.subr.bf16.mxu0 0
    %249 = vmatpush1.bf16.msra.mxu0 %v225
    %250 = vmatprep.subr.bf16.mxu0 0
    %251 = vmatpush1.bf16.msra.mxu0 0
    %252 = vmatprep.subr.bf16.mxu0 0
    %253 = vmatpush1.bf16.msra.mxu0 0
    %254 = vmatprep.subr.bf16.mxu0 0
    %255 = vmatpush1.bf16.msra.mxu0 0
    %256 = vmatprep.subr.bf16.mxu0 0
    %257 = vmatpush1.bf16.msra.mxu0 0
    %258 = vmatprep.subr.bf16.mxu0 0
    %259 = vmatpush1.bf16.msra.mxu0 0
    %260 = vmatprep.subr.bf16.mxu0 0
    %261 = vmatpush1.bf16.msra.mxu0 0
    %262 = vmatprep.subr.bf16.mxu0 0
    %263 = vmatpush1.bf16.msra.mxu0 0
    %264 = vmatprep.subr.bf16.mxu0 0
    %265 = vmatpush1.bf16.msra.mxu0 0
    %266 = vmatprep.mubr.bf16.mxu0 0
    %267 = vmatmul.mubr.bf16.gmra.mrb[0].mxu0 %v162
    %v268 = vpop.f32.mrb[0].mxu0
    %v269 = vadd.f32 %v184, %v268
    %v270 = vpop.f32.mrb[0].mxu0
    %v271 = vpop.f32.mrb[0].mxu0
    %v272 = vpop.f32.mrb[0].mxu0
    %273 = vdwg.mxu0
    %v274 = vlaneseq
    %v275 = vand.u32 %v274, 127
    %vm276 = vcmp.lt.s32.totalorder %v275, 8
    %v277 = vsel %vm276, %v269, -1e+30
    %278 = vmax.xlane.f32.xlu0 %v277
    %v279 = vpop.xlane.xlu0 %278
    %v280 = vsub.f32 %v277, %v279
    %v281 = vmul.f32 %v280, 1.442695
    %v282 = vpow.pop %v281
    %283 = vadd.xlane.f32.xlu0 %v282
    %v284 = vpop.xlane.xlu0 %283
    %v285 = vrcp.pop %v284
    %v286 = vmul.f32 %v282, %v285
    %287 = vst [vmem:[%s5] sm:$0xff] %v286
    // Predicated region
    $region30: #{_forward_impl.1} parent=1 // pred_check
      _
    $region31: #{_forward_impl.1} parent=1 // pred_check_branch
      %289 = sbr.rel (0) target = $region33
    $region32: #{_forward_impl.1} parent=1 // pred_region
      _
    $region33: #{_forward_impl.1} parent=1 // pred_fallthru
      _
    // Predicated region
    $region34: #{_forward_impl.1} parent=1 // pred_check
      _
    $region35: #{_forward_impl.1} parent=1 // pred_check_branch
      %291 = sbr.rel (0) target = $region37
    $region36: #{_forward_impl.1} parent=1 // pred_region
      _
    $region37: #{_forward_impl.1} parent=1 // pred_fallthru
      _
    %292 = vsyncpa [#allocation3], 1
    %293 = vsyncpa [#allocation5], 1

</llo_original>
